<compile_context>
chip_gen: v6e
topology: v6e:2x2x1
jax: 0.10.0
libtpu: 0.0.40
codegen_flags: <defaults>
</compile_context>

<pallas_src>
import jax
import jax.numpy as jnp
from jax.experimental import pallas as pl
from jax.experimental.pallas import tpu as pltpu

SUBLANES = 8  # f32 sublane count


def _round_up(x, m):
    return ((x + m - 1) // m) * m


def _ent_attn_kernel(x_ref, wt_ref, b_ref, o_ref):
    # x_ref : (TM, in_dim)      f32 — batch tile of flattened activations
    # wt_ref: (in_dim, hidden)  f32 — pre-transposed weight, VMEM-resident
    # b_ref : (1, hidden)       f32 — bias, VMEM-resident
    # o_ref : (TM, hidden)      f32
    acc = jnp.dot(x_ref[...], wt_ref[...], preferred_element_type=jnp.float32)
    o_ref[...] = (acc + b_ref[...]).astype(o_ref.dtype)


def prepare_ent_attn_params(weight, bias):
    """One-time parameter prep (do NOT call per forward).

    weight: (hidden, in_dim) f32 — PyTorch nn.Linear layout
    bias:   (hidden,)        f32
    Returns (w_t f32 (in_dim, hidden), b f32 (1, hidden)).
    Kept in f32: the kernel is HBM-bound, so the f32 MXU path is free and
    numerically exact vs the PyTorch reference.
    """
    w_t = jnp.asarray(weight, jnp.float32).T
    b = jnp.asarray(bias, jnp.float32)[None, :]
    return w_t, b


def _pick_tm(batch, in_dim, hidden, block_m):
    """Batch tile: multiple of 8 sublanes; as large as block_m / the VMEM
    budget allow, but small enough to give v7x's two TensorCores >= 2 grid
    steps when the batch is big enough to split."""
    tm = min(block_m, _round_up(batch, SUBLANES))
    # v7x: keep at least 2 grid steps when there's enough batch to split, so
    # dimension_semantics=("parallel",) can shard across both TCs. Neutral on
    # v5e/v6e (single TC).
    if batch > 2 * SUBLANES:
        tm = min(tm, _round_up(pl.cdiv(batch, 2), SUBLANES))
    tm = max(tm, SUBLANES)

    # Conservative vs the v7x 32 MiB scoped-VMEM default. At this problem size
    # the footprint is KiB–MiB scale, so block_m (not VMEM) is the limiter; if
    # a future config trips this, raise vmem_limit_bytes instead of shrinking tm.
    budget = 16 * 1024 * 1024

    def footprint(t):
        # 2x f32 x-tiles (double buffer) + resident f32 W^T + bias + 2x f32 out-tiles
        return 2 * t * in_dim * 4 + in_dim * hidden * 4 + hidden * 4 + 2 * t * hidden * 4

    while tm > SUBLANES and footprint(tm) > budget:
        tm = max(_round_up((tm // 2), SUBLANES), SUBLANES)
    return tm


def ent_attn_forward(x, w_t, b, *, block_m=1024):
    """Pallas path. x: (batch, ents, hidden) f32 -> (batch, hidden) f32."""
    batch, ents, h = x.shape
    in_dim = ents * h
    assert w_t.shape[0] == in_dim
    hidden = w_t.shape[1]

    # Same as torch .view — no dtype cast, no padding copy.
    x_flat = x.reshape(batch, in_dim)

    tm = _pick_tm(batch, in_dim, hidden, block_m)
    grid = (pl.cdiv(batch, tm),)  # ragged edge block masked by Pallas

    cost = pl.CostEstimate(
        flops=2 * batch * in_dim * hidden,
        transcendentals=0,
        bytes_accessed=(batch * in_dim * 4      # x (f32)
                        + in_dim * hidden * 4   # W^T (f32)
                        + hidden * 4            # bias (f32)
                        + batch * hidden * 4),  # out (f32)
    )

    out = pl.pallas_call(
        _ent_attn_kernel,
        out_shape=jax.ShapeDtypeStruct((batch, hidden), jnp.float32),
        grid=grid,
        in_specs=[
            pl.BlockSpec((tm, in_dim), lambda i: (i, 0)),      # batch-tiled x
            pl.BlockSpec((in_dim, hidden), lambda i: (0, 0)),  # weight: VMEM-resident
            pl.BlockSpec((1, hidden), lambda i: (0, 0)),       # bias: VMEM-resident
        ],
        out_specs=pl.BlockSpec((tm, hidden), lambda i: (i, 0)),
        compiler_params=pltpu.CompilerParams(
            dimension_semantics=("parallel",)),                # 2 TCs on v7x
        cost_estimate=cost,
    )(x_flat, w_t, b)

    return out.astype(x.dtype)


def ent_attn(x, w_t, b, *, block_m=1024, min_pallas_batch=256):
    """Dispatcher: tiny batches are a single small GEMM, where pallas_call
    fixed overhead exceeds the whole op — use a fused XLA dot there."""
    batch = x.shape[0]
    if batch < min_pallas_batch:
        return (x.reshape(batch, -1) @ w_t + b).astype(x.dtype)
    return ent_attn_forward(x, w_t, b, block_m=block_m)


if __name__ == "__main__":
    # config.HIDDEN = 32, n (ents) = 4, batch = 2
    HIDDEN = 32
    N_ENTS = 4
    BATCH = 2

    key = jax.random.PRNGKey(0)
    kx, kw, kb, kx2 = jax.random.split(key, 4)

    x = jax.random.normal(kx, (BATCH, N_ENTS, HIDDEN), dtype=jnp.float32)

    # Deterministic init mimicking nn.Linear default (uniform +-1/sqrt(fan_in)).
    fan_in = N_ENTS * HIDDEN
    bound = 1.0 / (fan_in ** 0.5)
    weight = jax.random.uniform(kw, (HIDDEN, fan_in), minval=-bound, maxval=bound,
                                dtype=jnp.float32)
    bias = jax.random.uniform(kb, (HIDDEN,), minval=-bound, maxval=bound,
                              dtype=jnp.float32)

    # One-time parameter prep (transpose only; stays f32).
    w_t, b = prepare_ent_attn_params(weight, bias)

    # --- check 1: tiny batch, single grid step (Pallas path forced; the
    # ent_attn() dispatcher would route this size to plain XLA) ---
    out = ent_attn_forward(x, w_t, b)
    jax.block_until_ready(out)
    ref = x.reshape(BATCH, -1) @ weight.T + bias
    assert out.shape == (BATCH, HIDDEN)
    # Both sides use the TPU MXU's default-precision f32 path; small slack for
    # per-pass rounding differences.
    assert jnp.allclose(out, ref, atol=1e-2, rtol=1e-2), "mismatch vs reference (small)"

    # --- check 2: multi-step grid with a ragged edge block (batch % tm != 0) ---
    BATCH2 = 20
    x2 = jax.random.normal(kx2, (BATCH2, N_ENTS, HIDDEN), dtype=jnp.float32)
    out2 = ent_attn_forward(x2, w_t, b, block_m=8)  # tm=8 -> grid=(3,), edge masked
    jax.block_until_ready(out2)
    ref2 = x2.reshape(BATCH2, -1) @ weight.T + bias
    assert out2.shape == (BATCH2, HIDDEN)
    assert jnp.allclose(out2, ref2, atol=1e-2, rtol=1e-2), "mismatch vs reference (tiled)"

    # --- check 3: dispatcher path (tiny batch -> fused XLA dot) agrees ---
    out3 = ent_attn(x, w_t, b)
    jax.block_until_ready(out3)
    assert jnp.allclose(out3, ref, atol=1e-2, rtol=1e-2), "mismatch vs reference (dispatch)"

    print("KERNEL_OK")
</pallas_src>

<mosaic_0001>
module attributes {stable_mosaic.version = 11 : i64} {
  func.func @_ent_attn_kernel(%arg0: i32, %arg1: memref<8x128xf32, #tpu.memory_space<vmem>>, %arg2: memref<128x32xf32, #tpu.memory_space<vmem>>, %arg3: memref<1x32xf32, #tpu.memory_space<vmem>>, %arg4: memref<8x32xf32, #tpu.memory_space<vmem>>) attributes {dimension_semantics = [#tpu.dimension_semantics<parallel>], iteration_bounds = array<i64: 1>, scalar_prefetch = 0 : i64, scratch_operands = 0 : i64, tpu.core_type = #tpu.core_type<tc>, window_params = [{transform_indices = @transform_0, window_bounds = array<i64: 8, 128>}, {pipeline_mode = #tpu.pipeline_mode<synchronous>, transform_indices = @transform_1, window_bounds = array<i64: 128, 32>}, {pipeline_mode = #tpu.pipeline_mode<synchronous>, transform_indices = @transform_2, window_bounds = array<i64: 1, 32>}, {transform_indices = @transform_3, window_bounds = array<i64: 8, 32>}]} {
    %c0 = arith.constant 0 : index
    %c0_0 = arith.constant 0 : index
    %0 = vector.load %arg1[%c0, %c0_0] : memref<8x128xf32, #tpu.memory_space<vmem>>, vector<8x128xf32>
    %c0_1 = arith.constant 0 : index
    %c0_2 = arith.constant 0 : index
    %1 = vector.load %arg2[%c0_1, %c0_2] : memref<128x32xf32, #tpu.memory_space<vmem>>, vector<128x32xf32>
    %cst = arith.constant dense<0.000000e+00> : vector<8x32xf32>
    %2 = tpu.matmul %0, %1, %cst {dimension_numbers = #tpu.dot_dimension_numbers<[1], [0], [0], [1], [0, 0, 1, 1], [], []>} : vector<8x128xf32>, vector<128x32xf32>, vector<8x32xf32> -> vector<8x32xf32>
    %c0_3 = arith.constant 0 : index
    %c0_4 = arith.constant 0 : index
    %3 = vector.load %arg3[%c0_3, %c0_4] : memref<1x32xf32, #tpu.memory_space<vmem>>, vector<1x32xf32>
    %4 = vector.broadcast %3 : vector<1x32xf32> to vector<8x32xf32>
    %5 = arith.addf %2, %4 : vector<8x32xf32>
    %c0_5 = arith.constant 0 : index
    %c0_6 = arith.constant 0 : index
    %6 = vector.load %arg4[%c0_5, %c0_6] : memref<8x32xf32, #tpu.memory_space<vmem>>, vector<8x32xf32>
    tpu.vector_store %arg4[%c0_5, %c0_6], %5 {strides = array<i32>} : memref<8x32xf32, #tpu.memory_space<vmem>>, vector<8x32xf32>,
    return
  }
  func.func @transform_0(%arg0: i32) -> (i32, i32) {
    %c0_i32 = arith.constant 0 : i32
    %c0_i32_0 = arith.constant 0 : i32
    return %arg0, %c0_i32 : i32, i32
  }
  func.func @transform_1(%arg0: i32) -> (i32, i32) {
    %c0_i32 = arith.constant 0 : i32
    %c0_i32_0 = arith.constant 0 : i32
    %c0_i32_1 = arith.constant 0 : i32
    return %c0_i32, %c0_i32_0 : i32, i32
  }
  func.func @transform_2(%arg0: i32) -> (i32, i32) {
    %c0_i32 = arith.constant 0 : i32
    %c0_i32_0 = arith.constant 0 : i32
    %c0_i32_1 = arith.constant 0 : i32
    return %c0_i32, %c0_i32_0 : i32, i32
  }
  func.func @transform_3(%arg0: i32) -> (i32, i32) {
    %c0_i32 = arith.constant 0 : i32
    %c0_i32_0 = arith.constant 0 : i32
    return %arg0, %c0_i32 : i32, i32
  }
}

</mosaic_0001>

<llo_original>
// kernel: tpu_custom_call.1
$region0: #{tpu_custom_call.1}
  #allocation0 [shape = 'u32[]', space=smem, size = 0x4, offset = 0x4, fixed_abs, tag = 'smem constant byte address 0x4 - core index']
  #allocation1 [shape = 'u32[144,128]{1,0:T(1,128)}', space=vmem, size = 0x12000, scoped, tag = 'internal scratch']
  %s0 = inlined_call_operand.vmem [shape: f32[2,128], index: 0, kind: input, shape index: {}]
  %s1 = inlined_call_operand.vmem [shape: f32[128,32], index: 1, kind: input, shape index: {}]
  %s2 = inlined_call_operand.vmem [shape: f32[1,32], index: 2, kind: input, shape index: {}]
  %s3 = inlined_call_operand.hbm [shape: f32[2,32], index: 3, kind: output, shape index: {}]
  %s4 = sld [smem:[#allocation0]]
  $region22: #{tpu_custom_call.1} parent=0
    _
  %s6 = ssub.s32 1, %s4
  %s7 = scalar_select 0, %s6, %s4
  $region1: #{tpu_custom_call.1} parent=0
    #allocation2 [shape = 'u8[4096]{0}', space=vmem, size = 0x1000, scoped, tag = 'output window, operand 0, single buffered']
    #allocation3 [shape = 's32[1]{0}', space=sflag, size = 0x4, scoped, tag = 'scoped memory for tpu_custom_call.1']
    %8 = vsyncpa [#allocation3], 0
    // Predicated region
    $region2: #{tpu_custom_call.1} parent=1 // pred_check
      _
    $region3: #{tpu_custom_call.1} parent=1 // pred_check_branch
      %10 = sbr.rel (0) target = $region5
    $region4: #{tpu_custom_call.1} parent=1 // pred_region
      _
    $region5: #{tpu_custom_call.1} parent=1 // pred_fallthru
      _
    // Predicated region
    $region6: #{tpu_custom_call.1} parent=1 // pred_check
      _
    $region7: #{tpu_custom_call.1} parent=1 // pred_check_branch
      %12 = sbr.rel (0) target = $region9
    $region8: #{tpu_custom_call.1} parent=1 // pred_region
      _
    $region9: #{tpu_custom_call.1} parent=1 // pred_fallthru
      _
    // Predicated region
    $region10: #{tpu_custom_call.1} parent=1 // pred_check
      _
    $region11: #{tpu_custom_call.1} parent=1 // pred_check_branch
      %14 = sbr.rel (0) target = $region13
    $region12: #{tpu_custom_call.1} parent=1 // pred_region
      _
    $region13: #{tpu_custom_call.1} parent=1 // pred_fallthru
      _
    %v15 = vld [vmem:[%s0] sm:$0xff]
    %v16 = vld [vmem:[%s1] sm:$0xff]
    %v17 = vld [vmem:[%s1 + $0x8] sm:$0xff]
    %v18 = vld [vmem:[%s1 + $0x10] sm:$0xff]
    %v19 = vld [vmem:[%s1 + $0x18] sm:$0xff]
    %v20 = vld [vmem:[%s1 + $0x20] sm:$0xff]
    %v21 = vld [vmem:[%s1 + $0x28] sm:$0xff]
    %v22 = vld [vmem:[%s1 + $0x30] sm:$0xff]
    %v23 = vld [vmem:[%s1 + $0x38] sm:$0xff]
    %v24 = vld [vmem:[%s1 + $0x40] sm:$0xff]
    %v25 = vld [vmem:[%s1 + $0x48] sm:$0xff]
    %v26 = vld [vmem:[%s1 + $0x50] sm:$0xff]
    %v27 = vld [vmem:[%s1 + $0x58] sm:$0xff]
    %v28 = vld [vmem:[%s1 + $0x60] sm:$0xff]
    %v29 = vld [vmem:[%s1 + $0x68] sm:$0xff]
    %v30 = vld [vmem:[%s1 + $0x70] sm:$0xff]
    %v31 = vld [vmem:[%s1 + $0x78] sm:$0xff]
    %v32 = vld [vmem:[%s2] sm:$0x1]
    %v34 = vlaneseq
    %v35 = vshrl.u32 %v34, 7
    %v36 = vsub.s32 0, %v35
    %v37 = vrot.slane %v32, %v36
    %39 = vmatprep.subr.mxu0 0.0
    %40 = vmatpush1.msra.mxu0 %v31
    %41 = vmatprep.subr.mxu0 0.0
    %42 = vmatpush1.msra.mxu0 %v30
    %43 = vmatprep.subr.mxu0 0.0
    %44 = vmatpush1.msra.mxu0 %v29
    %45 = vmatprep.subr.mxu0 0.0
    %46 = vmatpush1.msra.mxu0 %v28
    %47 = vmatprep.subr.mxu0 0.0
    %48 = vmatpush1.msra.mxu0 %v27
    %49 = vmatprep.subr.mxu0 0.0
    %50 = vmatpush1.msra.mxu0 %v26
    %51 = vmatprep.subr.mxu0 0.0
    %52 = vmatpush1.msra.mxu0 %v25
    %53 = vmatprep.subr.mxu0 0.0
    %54 = vmatpush1.msra.mxu0 %v24
    %55 = vmatprep.subr.mxu0 0.0
    %56 = vmatpush1.msra.mxu0 %v23
    %57 = vmatprep.subr.mxu0 0.0
    %58 = vmatpush1.msra.mxu0 %v22
    %59 = vmatprep.subr.mxu0 0.0
    %60 = vmatpush1.msra.mxu0 %v21
    %61 = vmatprep.subr.mxu0 0.0
    %62 = vmatpush1.msra.mxu0 %v20
    %63 = vmatprep.subr.mxu0 0.0
    %64 = vmatpush1.msra.mxu0 %v19
    %65 = vmatprep.subr.mxu0 0.0
    %66 = vmatpush1.msra.mxu0 %v18
    %67 = vmatprep.subr.mxu0 0.0
    %68 = vmatpush1.msra.mxu0 %v17
    %69 = vmatprep.subr.mxu0 0.0
    %70 = vmatpush1.msra.mxu0 %v16
    %71 = vmatprep.subr.mxu0 0.0
    %72 = vmatpush2.msra.mxu0 0.0
    %73 = vmatprep.subr.mxu0 0.0
    %74 = vmatpush2.msra.mxu0 0.0
    %75 = vmatprep.subr.mxu0 0.0
    %76 = vmatpush2.msra.mxu0 0.0
    %77 = vmatprep.subr.mxu0 0.0
    %78 = vmatpush2.msra.mxu0 0.0
    %79 = vmatprep.subr.mxu0 0.0
    %80 = vmatpush2.msra.mxu0 0.0
    %81 = vmatprep.subr.mxu0 0.0
    %82 = vmatpush2.msra.mxu0 0.0
    %83 = vmatprep.subr.mxu0 0.0
    %84 = vmatpush2.msra.mxu0 0.0
    %85 = vmatprep.subr.mxu0 0.0
    %86 = vmatpush2.msra.mxu0 0.0
    %87 = vmatprep.subr.mxu0 0.0
    %88 = vmatpush2.msra.mxu0 0.0
    %89 = vmatprep.subr.mxu0 0.0
    %90 = vmatpush2.msra.mxu0 0.0
    %91 = vmatprep.subr.mxu0 0.0
    %92 = vmatpush2.msra.mxu0 0.0
    %93 = vmatprep.subr.mxu0 0.0
    %94 = vmatpush2.msra.mxu0 0.0
    %95 = vmatprep.subr.mxu0 0.0
    %96 = vmatpush2.msra.mxu0 0.0
    %97 = vmatprep.subr.mxu0 0.0
    %98 = vmatpush2.msra.mxu0 0.0
    %99 = vmatprep.subr.mxu0 0.0
    %100 = vmatpush2.msra.mxu0 0.0
    %101 = vmatprep.subr.mxu0 0.0
    %102 = vmatpush2.msra.mxu0 0.0
    %103 = vmatprep.mubr.f32.mxu0 0.0
    %104 = vmatmul.mubr.f32.gmra.mxu0 %v15
    %v105 = vpop.f32.mrf.mxu0
    %v106 = vadd.f32 %v37, %v105
    %v107 = vpop.f32.mrf.mxu0
    %108 = vdwg.mxu0
    %vm109 = vcmask 261120
    %110 = vst.msk [vmem:[#allocation2] sm:$0xff] %vm109, %v106
    // Predicated region
    $region14: #{tpu_custom_call.1} parent=1 // pred_check
      _
    $region15: #{tpu_custom_call.1} parent=1 // pred_check_branch
      %112 = sbr.rel (0) target = $region17
    $region16: #{tpu_custom_call.1} parent=1 // pred_region
      %s114 = ssub.s32 128, 32
      %115 = vsyncadd [#allocation3], %s114
      %s116 = sshll.u32 [#allocation2], 4
      %s117 = int_to_ptr.vmem [resolvable:$true] %s116
      %122 = dma.vmem_to_hbm [thread:$0]  %s117, 32, %s3, [#allocation3], 32, 32, 2
    $region17: #{tpu_custom_call.1} parent=1 // pred_fallthru
      _
    // Predicated region
    $region18: #{tpu_custom_call.1} parent=1 // pred_check
      _
    $region19: #{tpu_custom_call.1} parent=1 // pred_check_branch
      %124 = sbr.rel (0) target = $region21
    $region20: #{tpu_custom_call.1} parent=1 // pred_region
      %125 = dma.done [#allocation3], 128
    $region21: #{tpu_custom_call.1} parent=1 // pred_fallthru
      _
    %126 = vsyncpa [#allocation3], 1

</llo_original>
